<compile_context>
chip_gen: v7x
topology: tpu7x:2x2x1
jax: 0.10.0
libtpu: 0.0.40
codegen_flags: <defaults>
</compile_context>

<pallas_src>
import functools

import jax
import jax.numpy as jnp
from jax import lax
from jax.experimental import pallas as pl
from jax.experimental.pallas import tpu as pltpu

LEAKY_SLOPE = 0.2          # AGE encoder uses LeakyReLU(0.2, inplace=True)
STRIDE1, PAD1 = 2, 1       # first conv of the canonical AGE encoder: Conv(nc, ndf, 4, 2, 1)


# ------------------------------ Pallas kernel ------------------------------ #

def _age_fused_kernel(a1_ref, w1_ref, b1_ref, w2_ref, b2_ref, o_ref, *,
                      n, ndf, hw, sphere):
    """Fused AGE encoder forward (conv1 + LeakyReLU + conv2 + optional sphere).

    a1_ref: [kh*kw*nc, n*oh*ow]  -- lane-dense im2col of the input (host-built);
            row = (ki*kw+kj)*nc + c, column = b*oh*ow + i*ow + j.
    w1_ref: [ndf, kh*kw*nc]      -- layer-1 weight, column order matches a1 rows.
    b1_ref: [ndf, 1]      f32    -- layer-1 bias (plain VPU add, not folded).
    w2_ref: [ndf, oh*ow, nz]     -- layer-2 weight, w2r[c, p, z] = w2[z, c, i, j].
    b2_ref: [1, nz]       f32    -- layer-2 bias.
    o_ref : [n, nz]       f32    -- latent (L2-normalized over nz if `sphere`).
    """
    # ---- layer 1: one MXU matmul, lane-dense activation [ndf, n*hw] (= [8,128]) ----
    h1 = jnp.dot(w1_ref[...], a1_ref[...], preferred_element_type=jnp.float32)
    h1 = h1 + b1_ref[...]                                  # bias: VPU add (f32)
    h1 = jnp.where(h1 > 0, h1, LEAKY_SLOPE * h1)           # LeakyReLU(0.2) in f32

    # ---- layer 2: full-extent stride-1 conv == contraction over (ndf, pixel).
    # Single relayout (split the column axis into (batch, pixel)), then a
    # canonical batched matmul contracting the pixel axis, then a cheap reduce
    # over the ndf batch axis.  No slices / concats / ones-padding.
    h1r = h1.reshape(ndf, n, hw).astype(w2_ref.dtype)      # [ndf, n, hw]
    s = lax.dot_general(
        h1r, w2_ref[...],
        dimension_numbers=(((2,), (1,)), ((0,), (0,))),    # batch=ndf, contract=pixel
        preferred_element_type=jnp.float32)                # [ndf, n, nz]
    out = jnp.sum(s, axis=0) + b2_ref[...]                 # [n, nz], bias in f32

    if sphere:
        # AGE sphere projection: x / ||x||_2 over the channel (nz) axis.
        # Precondition (matches the PyTorch original, which has no epsilon):
        # the latent must not be exactly zero, or the result is Inf/NaN.
        out = out * lax.rsqrt(jnp.sum(out * out, axis=1, keepdims=True))

    o_ref[...] = out


# -------------------------------- host prep -------------------------------- #

def _im2col_nchw(x, kh, kw, stride, pad):
    """[N,C,H,W] -> lane-dense A1 [kh*kw*C, N*OH*OW]; row=(ki*kw+kj)*C+c,
    col=b*OH*OW+i*OW+j.  Runs in XLA on the host side of the kernel (cheap,
    ~33 KB at these sizes) so the kernel body stays slice/concat free."""
    n, c, h, w = x.shape
    oh = (h + 2 * pad - kh) // stride + 1
    ow = (w + 2 * pad - kw) // stride + 1
    xp = jnp.pad(x, ((0, 0), (0, 0), (pad, pad), (pad, pad)))
    patches = [
        xp[:, :, ki:ki + (oh - 1) * stride + 1:stride,
                 kj:kj + (ow - 1) * stride + 1:stride]          # [n, c, oh, ow]
        for ki in range(kh) for kj in range(kw)
    ]
    a = jnp.stack(patches, axis=0)                              # [kh*kw, n, c, oh, ow]
    a = a.transpose(0, 2, 1, 3, 4).reshape(kh * kw * c, n * oh * ow)
    return a, oh, ow


def init_params(key, nc=4, ndf=8, nz=32, k1=4, k2=8):
    """Deterministic synthetic weights with torch Conv2d shapes [OC, IC, KH, KW]."""
    k_w1, k_b1, k_w2, k_b2 = jax.random.split(key, 4)
    return {
        "w1": 0.05 * jax.random.normal(k_w1, (ndf, nc, k1, k1), jnp.float32),
        "b1": 0.05 * jax.random.normal(k_b1, (ndf,), jnp.float32),
        "w2": 0.05 * jax.random.normal(k_w2, (nz, ndf, k2, k2), jnp.float32),
        "b2": 0.05 * jax.random.normal(k_b2, (nz,), jnp.float32),
    }


def make_age_net_forward(params, sphere=True, compute_dtype=jnp.float32):
    """Build the per-step forward.  Weight re-layout happens ONCE here (per
    model), not inside the per-step call.  `compute_dtype=jnp.bfloat16` uses the
    native bf16 MXU path for the matmul operands while keeping the accumulate,
    bias adds, LeakyReLU and sphere normalization in f32."""
    w1, b1, w2, b2 = params["w1"], params["b1"], params["w2"], params["b2"]
    ndf, nc, kh, kw = w1.shape
    nz, _, k2h, k2w = w2.shape
    assert (kh, kw) == (4, 4), "first conv must be the AGE encoder's Conv(., ., 4, 2, 1)"

    # Layer-1 weight: column (ki*kw+kj)*nc + c  <-  w1[:, c, ki, kj].
    w1m = w1.transpose(0, 2, 3, 1).reshape(ndf, kh * kw * nc).astype(compute_dtype)
    # Layer-2 weight in the layout the kernel's batched contraction wants:
    # w2r[c, p, z] = w2[z, c, i, j] with p = i*k2w + j.
    w2r = w2.transpose(1, 2, 3, 0).reshape(ndf, k2h * k2w, nz).astype(compute_dtype)
    b1c = b1.reshape(ndf, 1).astype(jnp.float32)
    b2r = b2.reshape(1, nz).astype(jnp.float32)

    @jax.jit
    def forward(x):
        """Age_Net.forward: output = net(input); if sphere: normalize(output).
        x: [N, nc, H, W] float32 (NCHW).  Returns [N, nz, 1, 1] float32."""
        n, c, h, w = x.shape
        assert c == nc
        a1, oh, ow = _im2col_nchw(x, kh, kw, STRIDE1, PAD1)
        assert (k2h, k2w) == (oh, ow), \
            "final conv must cover the full remaining spatial extent"
        a1 = a1.astype(compute_dtype)

        kernel = functools.partial(_age_fused_kernel, n=n, ndf=ndf, hw=oh * ow,
                                   sphere=sphere)
        out = pl.pallas_call(
            kernel,
            out_shape=jax.ShapeDtypeStruct((n, nz), jnp.float32),
            in_specs=[pl.BlockSpec(memory_space=pltpu.MemorySpace.VMEM)] * 5,
            out_specs=pl.BlockSpec(memory_space=pltpu.MemorySpace.VMEM),
        )(a1, w1m, b1c, w2r, b2r)
        return out.reshape(n, nz, 1, 1)

    return forward


# ------------------------------ pure-JAX reference -------------------------- #

def _reference_forward(x, params, sphere=True):
    """Pure-JAX reference (mirrors torch Conv2d semantics) for validation."""
    y = lax.conv_general_dilated(
        x, params["w1"], (STRIDE1, STRIDE1), ((PAD1, PAD1), (PAD1, PAD1)),
        dimension_numbers=("NCHW", "OIHW", "NCHW"))
    y = y + params["b1"].reshape(1, -1, 1, 1)
    y = jnp.where(y > 0, y, LEAKY_SLOPE * y)
    y = lax.conv_general_dilated(
        y, params["w2"], (1, 1), ((0, 0), (0, 0)),
        dimension_numbers=("NCHW", "OIHW", "NCHW"))
    y = y + params["b2"].reshape(1, -1, 1, 1)
    if sphere:
        y = y / jnp.sqrt(jnp.sum(y * y, axis=1, keepdims=True))
    return y


if __name__ == "__main__":
    key = jax.random.PRNGKey(0)
    k_x, k_p = jax.random.split(key)

    # Small shapes consistent with the module: batch=2, nc=4, 16x16 input,
    # ndf=8 hidden channels, nz=32 latent.
    x = jax.random.normal(k_x, (2, 4, 16, 16), jnp.float32)
    params = init_params(k_p, nc=4, ndf=8, nz=32, k1=4, k2=8)

    # f32-operand path (tight tolerance).
    fwd = make_age_net_forward(params, sphere=True, compute_dtype=jnp.float32)
    out = jax.block_until_ready(fwd(x))
    ref = _reference_forward(x, params, sphere=True)
    assert out.shape == (2, 32, 1, 1)
    assert bool(jnp.all(jnp.isfinite(out)))
    assert bool(jnp.allclose(out, ref, rtol=1e-4, atol=1e-5))
    # Sphere check: per-sample latent has unit L2 norm over the channel dim.
    norms = jnp.sqrt(jnp.sum(out * out, axis=1))
    assert bool(jnp.allclose(norms, 1.0, atol=1e-5))

    # Also exercise the sphere=False path of Age_Net.forward.
    fwd_plain = make_age_net_forward(params, sphere=False, compute_dtype=jnp.float32)
    out_plain = jax.block_until_ready(fwd_plain(x))
    ref_plain = _reference_forward(x, params, sphere=False)
    assert bool(jnp.allclose(out_plain, ref_plain, rtol=1e-4, atol=1e-5))

    # bf16 MXU-operand path (f32 accumulate / elementwise); looser tolerance.
    fwd_bf16 = make_age_net_forward(params, sphere=True, compute_dtype=jnp.bfloat16)
    out_bf16 = jax.block_until_ready(fwd_bf16(x))
    assert bool(jnp.all(jnp.isfinite(out_bf16)))
    assert bool(jnp.allclose(out_bf16, ref, rtol=3e-2, atol=3e-2))

    print("KERNEL_OK")
</pallas_src>

<mosaic_0001>
module attributes {stable_mosaic.version = 11 : i64} {
  func.func @_age_fused_kernel(%arg0: memref<64x128xf32, #tpu.memory_space<vmem>>, %arg1: memref<8x64xf32, #tpu.memory_space<vmem>>, %arg2: memref<8x1xf32, #tpu.memory_space<vmem>>, %arg3: memref<8x64x32xf32, #tpu.memory_space<vmem>>, %arg4: memref<1x32xf32, #tpu.memory_space<vmem>>, %arg5: memref<2x32xf32, #tpu.memory_space<vmem>>) attributes {dimension_semantics = [], scalar_prefetch = 0 : i64, scratch_operands = 0 : i64, tpu.core_type = #tpu.core_type<tc>} {
    %c0 = arith.constant 0 : index
    %c0_0 = arith.constant 0 : index
    %0 = vector.load %arg1[%c0, %c0_0] : memref<8x64xf32, #tpu.memory_space<vmem>>, vector<8x64xf32>
    %c0_1 = arith.constant 0 : index
    %c0_2 = arith.constant 0 : index
    %1 = vector.load %arg0[%c0_1, %c0_2] : memref<64x128xf32, #tpu.memory_space<vmem>>, vector<64x128xf32>
    %cst = arith.constant dense<0.000000e+00> : vector<8x128xf32>
    %2 = tpu.matmul %0, %1, %cst {dimension_numbers = #tpu.dot_dimension_numbers<[1], [0], [0], [1], [0, 0, 1, 1], [], []>} : vector<8x64xf32>, vector<64x128xf32>, vector<8x128xf32> -> vector<8x128xf32>
    %c0_3 = arith.constant 0 : index
    %c0_4 = arith.constant 0 : index
    %3 = vector.load %arg2[%c0_3, %c0_4] : memref<8x1xf32, #tpu.memory_space<vmem>>, vector<8x1xf32>
    %4 = vector.broadcast %3 : vector<8x1xf32> to vector<8x128xf32>
    %5 = arith.addf %2, %4 : vector<8x128xf32>
    %cst_5 = arith.constant 0.000000e+00 : f32
    %6 = vector.broadcast %cst_5 : f32 to vector<8x128xf32>
    %7 = arith.cmpf ogt, %5, %6 : vector<8x128xf32>
    %cst_6 = arith.constant 2.000000e-01 : f32
    %8 = vector.broadcast %cst_6 : f32 to vector<8x128xf32>
    %9 = arith.mulf %8, %5 : vector<8x128xf32>
    %10 = arith.select %7, %5, %9 : vector<8x128xi1>, vector<8x128xf32>
    %11 = vector.shape_cast %10 : vector<8x128xf32> to vector<8x2x64xf32>
    %c0_7 = arith.constant 0 : index
    %c0_8 = arith.constant 0 : index
    %c0_9 = arith.constant 0 : index
    %12 = vector.load %arg3[%c0_7, %c0_8, %c0_9] : memref<8x64x32xf32, #tpu.memory_space<vmem>>, vector<8x64x32xf32>
    %cst_10 = arith.constant dense<0.000000e+00> : vector<8x2x32xf32>
    %13 = tpu.matmul %11, %12, %cst_10 {dimension_numbers = #tpu.dot_dimension_numbers<[2], [1], [1], [2], [0, 0, 0, 1, 1, 2], [0], [0]>} : vector<8x2x64xf32>, vector<8x64x32xf32>, vector<8x2x32xf32> -> vector<8x2x32xf32>
    %cst_11 = arith.constant dense<0.000000e+00> : vector<2x32xf32>
    %14 = vector.multi_reduction <add>, %13, %cst_11 [0] : vector<8x2x32xf32> to vector<2x32xf32>
    %c0_12 = arith.constant 0 : index
    %c0_13 = arith.constant 0 : index
    %15 = vector.load %arg4[%c0_12, %c0_13] : memref<1x32xf32, #tpu.memory_space<vmem>>, vector<1x32xf32>
    %16 = vector.broadcast %15 : vector<1x32xf32> to vector<2x32xf32>
    %17 = arith.addf %14, %16 : vector<2x32xf32>
    %18 = arith.mulf %17, %17 : vector<2x32xf32>
    %cst_14 = arith.constant dense<0.000000e+00> : vector<2xf32>
    %19 = vector.multi_reduction <add>, %18, %cst_14 [1] : vector<2x32xf32> to vector<2xf32>
    %20 = vector.shape_cast %19 : vector<2xf32> to vector<2x1xf32>
    %21 = math.rsqrt %20 : vector<2x1xf32>
    %22 = vector.broadcast %21 : vector<2x1xf32> to vector<2x32xf32>
    %23 = arith.mulf %17, %22 : vector<2x32xf32>
    %c0_15 = arith.constant 0 : index
    %c0_16 = arith.constant 0 : index
    %24 = vector.load %arg5[%c0_15, %c0_16] : memref<2x32xf32, #tpu.memory_space<vmem>>, vector<2x32xf32>
    tpu.vector_store %arg5[%c0_15, %c0_16], %23 {strides = array<i32>} : memref<2x32xf32, #tpu.memory_space<vmem>>, vector<2x32xf32>,
    return
  }
}

</mosaic_0001>

<llo_original>
// kernel: forward.1
$region0: #{forward.1}
  #allocation0 [shape = 'u32[]', space=smem, size = 0x4, offset = 0x4, fixed_abs, tag = 'smem constant byte address 0x4 - core index']
  #allocation1 [shape = 'u32[144,128]{1,0:T(1,128)}', space=vmem, size = 0x12000, scoped, tag = 'internal scratch']
  %s0 = inlined_call_operand.vmem [shape: f32[64,128], index: 0, kind: input, shape index: {}]
  %s1 = inlined_call_operand.vmem [shape: f32[8,64], index: 1, kind: input, shape index: {}]
  %s2 = inlined_call_operand.vmem [shape: f32[8,1], index: 2, kind: input, shape index: {}]
  %s3 = inlined_call_operand.vmem [shape: f32[8,64,32], index: 3, kind: input, shape index: {}]
  %s4 = inlined_call_operand.vmem [shape: f32[1,32], index: 4, kind: input, shape index: {}]
  %s5 = inlined_call_operand.hbm [shape: f32[2,32], index: 5, kind: output, shape index: {}]
  %s6 = sld [smem:[#allocation0]]
  $region30: #{forward.1} parent=0
    _
  %s8 = ssub.s32 1, %s6
  %s9 = scalar_select 0, %s8, %s6
  $region1: #{forward.1} parent=0
    #allocation2 [shape = 'u8[1024]{0}', space=vmem, size = 0x400, scoped, tag = 'output window, operand 0, single buffered']
    #allocation3 [shape = 's32[1]{0}', space=sflag, size = 0x4, scoped, tag = 'scoped memory for forward.1']
    %10 = vsyncpa [#allocation3], 0
    // Predicated region
    $region2: #{forward.1} parent=1 // pred_check
      _
    $region3: #{forward.1} parent=1 // pred_check_branch
      %12 = sbr.rel (0) target = $region5
    $region4: #{forward.1} parent=1 // pred_region
      _
    $region5: #{forward.1} parent=1 // pred_fallthru
      _
    // Predicated region
    $region6: #{forward.1} parent=1 // pred_check
      _
    $region7: #{forward.1} parent=1 // pred_check_branch
      %14 = sbr.rel (0) target = $region9
    $region8: #{forward.1} parent=1 // pred_region
      _
    $region9: #{forward.1} parent=1 // pred_fallthru
      _
    // Predicated region
    $region10: #{forward.1} parent=1 // pred_check
      _
    $region11: #{forward.1} parent=1 // pred_check_branch
      %16 = sbr.rel (0) target = $region13
    $region12: #{forward.1} parent=1 // pred_region
      _
    $region13: #{forward.1} parent=1 // pred_fallthru
      _
    // Predicated region
    $region14: #{forward.1} parent=1 // pred_check
      _
    $region15: #{forward.1} parent=1 // pred_check_branch
      %18 = sbr.rel (0) target = $region17
    $region16: #{forward.1} parent=1 // pred_region
      _
    $region17: #{forward.1} parent=1 // pred_fallthru
      _
    // Predicated region
    $region18: #{forward.1} parent=1 // pred_check
      _
    $region19: #{forward.1} parent=1 // pred_check_branch
      %20 = sbr.rel (0) target = $region21
    $region20: #{forward.1} parent=1 // pred_region
      _
    $region21: #{forward.1} parent=1 // pred_fallthru
      _
    %v21 = vld [vmem:[%s1] sm:$0xff]
    %v22 = vld [vmem:[%s0] sm:$0xff]
    %v23 = vld [vmem:[%s0 + $0x8] sm:$0xff]
    %v24 = vld [vmem:[%s0 + $0x10] sm:$0xff]
    %v25 = vld [vmem:[%s0 + $0x18] sm:$0xff]
    %v26 = vld [vmem:[%s0 + $0x20] sm:$0xff]
    %v27 = vld [vmem:[%s0 + $0x28] sm:$0xff]
    %v28 = vld [vmem:[%s0 + $0x30] sm:$0xff]
    %v29 = vld [vmem:[%s0 + $0x38] sm:$0xff]
    %v30 = vld [vmem:[%s2] sm:$0xff]
    %32 = vset.pattern.permute.xlu0 0
    %33 = vperm.xlu0 %32, %v30
    %v34 = vpop.permute.xlu0 %33
    %vm36 = vcmask 523264
    %v38 = vsel %vm36, %v21, 0
    %40 = vmatprep.subr.mxu0 0.0
    %41 = vmatpush1.msra.mxu0 %v22
    %42 = vmatprep.subr.mxu0 0.0
    %43 = vmatpush1.msra.mxu0 %v23
    %44 = vmatprep.subr.mxu0 0.0
    %45 = vmatpush1.msra.mxu0 %v24
    %46 = vmatprep.subr.mxu0 0.0
    %47 = vmatpush1.msra.mxu0 %v25
    %48 = vmatprep.subr.mxu0 0.0
    %49 = vmatpush1.msra.mxu0 %v26
    %50 = vmatprep.subr.mxu0 0.0
    %51 = vmatpush1.msra.mxu0 %v27
    %52 = vmatprep.subr.mxu0 0.0
    %53 = vmatpush1.msra.mxu0 %v28
    %54 = vmatprep.subr.mxu0 0.0
    %55 = vmatpush1.msra.mxu0 %v29
    %56 = vmatprep.subr.mxu0 0.0
    %57 = vmatpush1.msra.mxu0 0.0
    %58 = vmatprep.subr.mxu0 0.0
    %59 = vmatpush1.msra.mxu0 0.0
    %60 = vmatprep.subr.mxu0 0.0
    %61 = vmatpush1.msra.mxu0 0.0
    %62 = vmatprep.subr.mxu0 0.0
    %63 = vmatpush1.msra.mxu0 0.0
    %64 = vmatprep.subr.mxu0 0.0
    %65 = vmatpush1.msra.mxu0 0.0
    %66 = vmatprep.subr.mxu0 0.0
    %67 = vmatpush1.msra.mxu0 0.0
    %68 = vmatprep.subr.mxu0 0.0
    %69 = vmatpush1.msra.mxu0 0.0
    %70 = vmatprep.subr.mxu0 0.0
    %71 = vmatpush1.msra.mxu0 0.0
    %72 = vmatprep.subr.mxu0 0.0
    %73 = vmatpush1.msra.mxu0 0.0
    %74 = vmatprep.subr.mxu0 0.0
    %75 = vmatpush1.msra.mxu0 0.0
    %76 = vmatprep.subr.mxu0 0.0
    %77 = vmatpush1.msra.mxu0 0.0
    %78 = vmatprep.subr.mxu0 0.0
    %79 = vmatpush1.msra.mxu0 0.0
    %80 = vmatprep.subr.mxu0 0.0
    %81 = vmatpush1.msra.mxu0 0.0
    %82 = vmatprep.subr.mxu0 0.0
    %83 = vmatpush1.msra.mxu0 0.0
    %84 = vmatprep.subr.mxu0 0.0
    %85 = vmatpush1.msra.mxu0 0.0
    %86 = vmatprep.subr.mxu0 0.0
    %87 = vmatpush1.msra.mxu0 0.0
    %88 = vmatprep.subr.mxu0 0.0
    %89 = vmatpush1.msra.mxu0 0.0
    %90 = vmatprep.subr.mxu0 0.0
    %91 = vmatpush1.msra.mxu0 0.0
    %92 = vmatprep.subr.mxu0 0.0
    %93 = vmatpush1.msra.mxu0 0.0
    %94 = vmatprep.subr.mxu0 0.0
    %95 = vmatpush1.msra.mxu0 0.0
    %96 = vmatprep.subr.mxu0 0.0
    %97 = vmatpush1.msra.mxu0 0.0
    %98 = vmatprep.subr.mxu0 0.0
    %99 = vmatpush1.msra.mxu0 0.0
    %100 = vmatprep.subr.mxu0 0.0
    %101 = vmatpush1.msra.mxu0 0.0
    %102 = vmatprep.subr.mxu0 0.0
    %103 = vmatpush1.msra.mxu0 0.0
    %104 = vmatprep.mubr.f32.mxu0 0.0
    %105 = vmatmul.mubr.f32.gmra.mrb[0].mxu0 %v38
    %v106 = vpop.f32.mrb[0].mxu0
    %v107 = vadd.f32 %v34, %v106
    %v108 = vpop.f32.mrb[0].mxu0
    %109 = vdwg.mxu0
    %vm110 = vcmp.gt.f32.partialorder %v107, 0.0
    %v111 = vmul.f32 %v107, 0.2
    %v112 = vsel %vm110, %v107, %v111
    %114 = vrot.lane.b32.xlu0 %v112, 64
    %v115 = vpop.permute.xlu0 %114
    %v117 = vcombine.high %v112, 0.0
    %v119 = vunpack.c.l.s4 1983009808
    %v120 = vunpack.c.0.s8 %v119
    %v121 = vlaneseq
    %v122 = vshrl.u32 %v121, 7
    %v123 = vsub.s32 %v120, %v122
    %v124 = vrot.slane %v112, %v123
    %v126 = vunpack.c.l.s4 1983009808
    %v127 = vunpack.c.0.s8 %v126
    %v128 = vlaneseq
    %v129 = vshrl.u32 %v128, 7
    %v130 = vsub.s32 %v127, %v129
    %v131 = vrot.slane %v117, %v130
    %v132 = vcombine.high %v115, 0.0
    %v134 = vunpack.c.l.s4 1983009808
    %v135 = vunpack.c.0.s8 %v134
    %v136 = vlaneseq
    %v137 = vshrl.u32 %v136, 7
    %v138 = vsub.s32 %v135, %v137
    %v139 = vrot.slane %v115, %v138
    %v141 = vunpack.c.l.s4 1983009808
    %v142 = vunpack.c.0.s8 %v141
    %v143 = vlaneseq
    %v144 = vshrl.u32 %v143, 7
    %v145 = vsub.s32 %v142, %v144
    %v146 = vrot.slane %v132, %v145
    %v147 = vcombine.low %v124, %v139
    %v148 = vcombine.high %v124, %v139
    %v150 = vunpack.c.l.s4 1934713408
    %v151 = vunpack.c.0.s8 %v150
    %v152 = vlaneseq
    %v153 = vshrl.u32 %v152, 7
    %v154 = vsub.s32 %v151, %v153
    %v155 = vrot.slane %v147, %v154
    %v157 = vunpack.c.l.s4 1934713408
    %v158 = vunpack.c.0.s8 %v157
    %v159 = vlaneseq
    %v160 = vshrl.u32 %v159, 7
    %v161 = vsub.s32 %v158, %v160
    %v162 = vrot.slane %v148, %v161
    %v163 = vcombine.low %v131, %v146
    %v164 = vcombine.high %v131, %v146
    %v166 = vunpack.c.l.s4 1934713408
    %v167 = vunpack.c.0.s8 %v166
    %v168 = vlaneseq
    %v169 = vshrl.u32 %v168, 7
    %v170 = vsub.s32 %v167, %v169
    %v171 = vrot.slane %v163, %v170
    %v173 = vunpack.c.l.s4 1934713408
    %v174 = vunpack.c.0.s8 %v173
    %v175 = vlaneseq
    %v176 = vshrl.u32 %v175, 7
    %v177 = vsub.s32 %v174, %v176
    %v178 = vrot.slane %v164, %v177
    %v179 = vcombine.high %v155, 0.0
    %v180 = vcombine.high %v162, 0.0
    %v181 = vcombine.high %v171, 0.0
    %v182 = vcombine.high %v178, 0.0
    %v183 = vld [vmem:[%s3] sm:$0xff]
    %v184 = vld [vmem:[%s3 + $0x8] sm:$0xff]
    %v185 = vld [vmem:[%s3 + $0x10] sm:$0xff]
    %v186 = vld [vmem:[%s3 + $0x18] sm:$0xff]
    %v187 = vld [vmem:[%s3 + $0x20] sm:$0xff]
    %v188 = vld [vmem:[%s3 + $0x28] sm:$0xff]
    %v189 = vld [vmem:[%s3 + $0x30] sm:$0xff]
    %v190 = vld [vmem:[%s3 + $0x38] sm:$0xff]
    %v191 = vld [vmem:[%s3 + $0x40] sm:$0xff]
    %v192 = vld [vmem:[%s3 + $0x48] sm:$0xff]
    %v193 = vld [vmem:[%s3 + $0x50] sm:$0xff]
    %v194 = vld [vmem:[%s3 + $0x58] sm:$0xff]
    %v195 = vld [vmem:[%s3 + $0x60] sm:$0xff]
    %v196 = vld [vmem:[%s3 + $0x68] sm:$0xff]
    %v197 = vld [vmem:[%s3 + $0x70] sm:$0xff]
    %v198 = vld [vmem:[%s3 + $0x78] sm:$0xff]
    %v199 = vld [vmem:[%s3 + $0x80] sm:$0xff]
    %v200 = vld [vmem:[%s3 + $0x88] sm:$0xff]
    %v201 = vld [vmem:[%s3 + $0x90] sm:$0xff]
    %v202 = vld [vmem:[%s3 + $0x98] sm:$0xff]
    %v203 = vld [vmem:[%s3 + $0xa0] sm:$0xff]
    %v204 = vld [vmem:[%s3 + $0xa8] sm:$0xff]
    %v205 = vld [vmem:[%s3 + $0xb0] sm:$0xff]
    %v206 = vld [vmem:[%s3 + $0xb8] sm:$0xff]
    %v207 = vld [vmem:[%s3 + $0xc0] sm:$0xff]
    %v208 = vld [vmem:[%s3 + $0xc8] sm:$0xff]
    %v209 = vld [vmem:[%s3 + $0xd0] sm:$0xff]
    %v210 = vld [vmem:[%s3 + $0xd8] sm:$0xff]
    %v211 = vld [vmem:[%s3 + $0xe0] sm:$0xff]
    %v212 = vld [vmem:[%s3 + $0xe8] sm:$0xff]
    %v213 = vld [vmem:[%s3 + $0xf0] sm:$0xff]
    %v214 = vld [vmem:[%s3 + $0xf8] sm:$0xff]
    %v215 = vld [vmem:[%s3 + $0x100] sm:$0xff]
    %v216 = vld [vmem:[%s3 + $0x108] sm:$0xff]
    %v217 = vld [vmem:[%s3 + $0x110] sm:$0xff]
    %v218 = vld [vmem:[%s3 + $0x118] sm:$0xff]
    %v219 = vld [vmem:[%s3 + $0x120] sm:$0xff]
    %v220 = vld [vmem:[%s3 + $0x128] sm:$0xff]
    %v221 = vld [vmem:[%s3 + $0x130] sm:$0xff]
    %v222 = vld [vmem:[%s3 + $0x138] sm:$0xff]
    %v223 = vld [vmem:[%s3 + $0x140] sm:$0xff]
    %v224 = vld [vmem:[%s3 + $0x148] sm:$0xff]
    %v225 = vld [vmem:[%s3 + $0x150] sm:$0xff]
    %v226 = vld [vmem:[%s3 + $0x158] sm:$0xff]
    %v227 = vld [vmem:[%s3 + $0x160] sm:$0xff]
    %v228 = vld [vmem:[%s3 + $0x168] sm:$0xff]
    %v229 = vld [vmem:[%s3 + $0x170] sm:$0xff]
    %v230 = vld [vmem:[%s3 + $0x178] sm:$0xff]
    %v231 = vld [vmem:[%s3 + $0x180] sm:$0xff]
    %v232 = vld [vmem:[%s3 + $0x188] sm:$0xff]
    %v233 = vld [vmem:[%s3 + $0x190] sm:$0xff]
    %v234 = vld [vmem:[%s3 + $0x198] sm:$0xff]
    %v235 = vld [vmem:[%s3 + $0x1a0] sm:$0xff]
    %v236 = vld [vmem:[%s3 + $0x1a8] sm:$0xff]
    %v237 = vld [vmem:[%s3 + $0x1b0] sm:$0xff]
    %v238 = vld [vmem:[%s3 + $0x1b8] sm:$0xff]
    %v239 = vld [vmem:[%s3 + $0x1c0] sm:$0xff]
    %v240 = vld [vmem:[%s3 + $0x1c8] sm:$0xff]
    %v241 = vld [vmem:[%s3 + $0x1d0] sm:$0xff]
    %v242 = vld [vmem:[%s3 + $0x1d8] sm:$0xff]
    %v243 = vld [vmem:[%s3 + $0x1e0] sm:$0xff]
    %v244 = vld [vmem:[%s3 + $0x1e8] sm:$0xff]
    %v245 = vld [vmem:[%s3 + $0x1f0] sm:$0xff]
    %v246 = vld [vmem:[%s3 + $0x1f8] sm:$0xff]
    %v248 = vsel %vm36, %v155, 0
    %250 = vmatprep.subr.mxu0 0.0
    %251 = vmatpush1.msra.mxu0 %v183
    %252 = vmatprep.subr.mxu0 0.0
    %253 = vmatpush1.msra.mxu0 %v184
    %254 = vmatprep.subr.mxu0 0.0
    %255 = vmatpush1.msra.mxu0 %v185
    %256 = vmatprep.subr.mxu0 0.0
    %257 = vmatpush1.msra.mxu0 %v186
    %258 = vmatprep.subr.mxu0 0.0
    %259 = vmatpush1.msra.mxu0 %v187
    %260 = vmatprep.subr.mxu0 0.0
    %261 = vmatpush1.msra.mxu0 %v188
    %262 = vmatprep.subr.mxu0 0.0
    %263 = vmatpush1.msra.mxu0 %v189
    %264 = vmatprep.subr.mxu0 0.0
    %265 = vmatpush1.msra.mxu0 %v190
    %266 = vmatprep.subr.mxu0 0.0
    %267 = vmatpush1.msra.mxu0 0.0
    %268 = vmatprep.subr.mxu0 0.0
    %269 = vmatpush1.msra.mxu0 0.0
    %270 = vmatprep.subr.mxu0 0.0
    %271 = vmatpush1.msra.mxu0 0.0
    %272 = vmatprep.subr.mxu0 0.0
    %273 = vmatpush1.msra.mxu0 0.0
    %274 = vmatprep.subr.mxu0 0.0
    %275 = vmatpush1.msra.mxu0 0.0
    %276 = vmatprep.subr.mxu0 0.0
    %277 = vmatpush1.msra.mxu0 0.0
    %278 = vmatprep.subr.mxu0 0.0
    %279 = vmatpush1.msra.mxu0 0.0
    %280 = vmatprep.subr.mxu0 0.0
    %281 = vmatpush1.msra.mxu0 0.0
    %282 = vmatprep.subr.mxu0 0.0
    %283 = vmatpush1.msra.mxu0 0.0
    %284 = vmatprep.subr.mxu0 0.0
    %285 = vmatpush1.msra.mxu0 0.0
    %286 = vmatprep.subr.mxu0 0.0
    %287 = vmatpush1.msra.mxu0 0.0
    %288 = vmatprep.subr.mxu0 0.0
    %289 = vmatpush1.msra.mxu0 0.0
    %290 = vmatprep.subr.mxu0 0.0
    %291 = vmatpush1.msra.mxu0 0.0
    %292 = vmatprep.subr.mxu0 0.0
    %293 = vmatpush1.msra.mxu0 0.0
    %294 = vmatprep.subr.mxu0 0.0
    %295 = vmatpush1.msra.mxu0 0.0
    %296 = vmatprep.subr.mxu0 0.0
    %297 = vmatpush1.msra.mxu0 0.0
    %298 = vmatprep.subr.mxu0 0.0
    %299 = vmatpush1.msra.mxu0 0.0
    %300 = vmatprep.subr.mxu0 0.0
    %301 = vmatpush1.msra.mxu0 0.0
    %302 = vmatprep.subr.mxu0 0.0
    %303 = vmatpush1.msra.mxu0 0.0
    %304 = vmatprep.subr.mxu0 0.0
    %305 = vmatpush1.msra.mxu0 0.0
    %306 = vmatprep.subr.mxu0 0.0
    %307 = vmatpush1.msra.mxu0 0.0
    %308 = vmatprep.subr.mxu0 0.0
    %309 = vmatpush1.msra.mxu0 0.0
    %310 = vmatprep.subr.mxu0 0.0
    %311 = vmatpush1.msra.mxu0 0.0
    %312 = vmatprep.subr.mxu0 0.0
    %313 = vmatpush1.msra.mxu0 0.0
    %314 = vmatprep.mubr.f32.mxu0 0.0
    %315 = vmatmul.mubr.f32.gmra.mrb[0].mxu0 %v248
    %v316 = vpop.f32.mrb[0].mxu0
    %v317 = vadd.f32 0.0, %v316
    %v318 = vpop.f32.mrb[0].mxu0
    %319 = vdwg.mxu0
    %v321 = vsel %vm36, %v179, 0
    %323 = vmatprep.subr.mxu0 0.0
    %324 = vmatpush1.msra.mxu0 %v191
    %325 = vmatprep.subr.mxu0 0.0
    %326 = vmatpush1.msra.mxu0 %v192
    %327 = vmatprep.subr.mxu0 0.0
    %328 = vmatpush1.msra.mxu0 %v193
    %329 = vmatprep.subr.mxu0 0.0
    %330 = vmatpush1.msra.mxu0 %v194
    %331 = vmatprep.subr.mxu0 0.0
    %332 = vmatpush1.msra.mxu0 %v195
    %333 = vmatprep.subr.mxu0 0.0
    %334 = vmatpush1.msra.mxu0 %v196
    %335 = vmatprep.subr.mxu0 0.0
    %336 = vmatpush1.msra.mxu0 %v197
    %337 = vmatprep.subr.mxu0 0.0
    %338 = vmatpush1.msra.mxu0 %v198
    %339 = vmatprep.subr.mxu0 0.0
    %340 = vmatpush1.msra.mxu0 0.0
    %341 = vmatprep.subr.mxu0 0.0
    %342 = vmatpush1.msra.mxu0 0.0
    %343 = vmatprep.subr.mxu0 0.0
    %344 = vmatpush1.msra.mxu0 0.0
    %345 = vmatprep.subr.mxu0 0.0
    %346 = vmatpush1.msra.mxu0 0.0
    %347 = vmatprep.subr.mxu0 0.0
    %348 = vmatpush1.msra.mxu0 0.0
    %349 = vmatprep.subr.mxu0 0.0
    %350 = vmatpush1.msra.mxu0 0.0
    %351 = vmatprep.subr.mxu0 0.0
    %352 = vmatpush1.msra.mxu0 0.0
    %353 = vmatprep.subr.mxu0 0.0
    %354 = vmatpush1.msra.mxu0 0.0
    %355 = vmatprep.subr.mxu0 0.0
    %356 = vmatpush1.msra.mxu0 0.0
    %357 = vmatprep.subr.mxu0 0.0
    %358 = vmatpush1.msra.mxu0 0.0
    %359 = vmatprep.subr.mxu0 0.0
    %360 = vmatpush1.msra.mxu0 0.0
    %361 = vmatprep.subr.mxu0 0.0
    %362 = vmatpush1.msra.mxu0 0.0
    %363 = vmatprep.subr.mxu0 0.0
    %364 = vmatpush1.msra.mxu0 0.0
    %365 = vmatprep.subr.mxu0 0.0
    %366 = vmatpush1.msra.mxu0 0.0
    %367 = vmatprep.subr.mxu0 0.0
    %368 = vmatpush1.msra.mxu0 0.0
    %369 = vmatprep.subr.mxu0 0.0
    %370 = vmatpush1.msra.mxu0 0.0
    %371 = vmatprep.subr.mxu0 0.0
    %372 = vmatpush1.msra.mxu0 0.0
    %373 = vmatprep.subr.mxu0 0.0
    %374 = vmatpush1.msra.mxu0 0.0
    %375 = vmatprep.subr.mxu0 0.0
    %376 = vmatpush1.msra.mxu0 0.0
    %377 = vmatprep.subr.mxu0 0.0
    %378 = vmatpush1.msra.mxu0 0.0
    %379 = vmatprep.subr.mxu0 0.0
    %380 = vmatpush1.msra.mxu0 0.0
    %381 = vmatprep.subr.mxu0 0.0
    %382 = vmatpush1.msra.mxu0 0.0
    %383 = vmatprep.subr.mxu0 0.0
    %384 = vmatpush1.msra.mxu0 0.0
    %385 = vmatprep.subr.mxu0 0.0
    %386 = vmatpush1.msra.mxu0 0.0
    %387 = vmatprep.mubr.f32.mxu0 0.0
    %388 = vmatmul.mubr.f32.gmra.mrb[0].mxu0 %v321
    %v389 = vpop.f32.mrb[0].mxu0
    %v390 = vadd.f32 0.0, %v389
    %v391 = vpop.f32.mrb[0].mxu0
    %392 = vdwg.mxu0
    %v394 = vsel %vm36, %v162, 0
    %396 = vmatprep.subr.mxu0 0.0
    %397 = vmatpush1.msra.mxu0 %v199
    %398 = vmatprep.subr.mxu0 0.0
    %399 = vmatpush1.msra.mxu0 %v200
    %400 = vmatprep.subr.mxu0 0.0
    %401 = vmatpush1.msra.mxu0 %v201
    %402 = vmatprep.subr.mxu0 0.0
    %403 = vmatpush1.msra.mxu0 %v202
    %404 = vmatprep.subr.mxu0 0.0
    %405 = vmatpush1.msra.mxu0 %v203
    %406 = vmatprep.subr.mxu0 0.0
    %407 = vmatpush1.msra.mxu0 %v204
    %408 = vmatprep.subr.mxu0 0.0
    %409 = vmatpush1.msra.mxu0 %v205
    %410 = vmatprep.subr.mxu0 0.0
    %411 = vmatpush1.msra.mxu0 %v206
    %412 = vmatprep.subr.mxu0 0.0
    %413 = vmatpush1.msra.mxu0 0.0
    %414 = vmatprep.subr.mxu0 0.0
    %415 = vmatpush1.msra.mxu0 0.0
    %416 = vmatprep.subr.mxu0 0.0
    %417 = vmatpush1.msra.mxu0 0.0
    %418 = vmatprep.subr.mxu0 0.0
    %419 = vmatpush1.msra.mxu0 0.0
    %420 = vmatprep.subr.mxu0 0.0
    %421 = vmatpush1.msra.mxu0 0.0
    %422 = vmatprep.subr.mxu0 0.0
    %423 = vmatpush1.msra.mxu0 0.0
    %424 = vmatprep.subr.mxu0 0.0
    %425 = vmatpush1.msra.mxu0 0.0
    %426 = vmatprep.subr.mxu0 0.0
    %427 = vmatpush1.msra.mxu0 0.0
    %428 = vmatprep.subr.mxu0 0.0
    %429 = vmatpush1.msra.mxu0 0.0
    %430 = vmatprep.subr.mxu0 0.0
    %431 = vmatpush1.msra.mxu0 0.0
    %432 = vmatprep.subr.mxu0 0.0
    %433 = vmatpush1.msra.mxu0 0.0
    %434 = vmatprep.subr.mxu0 0.0
    %435 = vmatpush1.msra.mxu0 0.0
    %436 = vmatprep.subr.mxu0 0.0
    %437 = vmatpush1.msra.mxu0 0.0
    %438 = vmatprep.subr.mxu0 0.0
    %439 = vmatpush1.msra.mxu0 0.0
    %440 = vmatprep.subr.mxu0 0.0
    %441 = vmatpush1.msra.mxu0 0.0
    %442 = vmatprep.subr.mxu0 0.0
    %443 = vmatpush1.msra.mxu0 0.0
    %444 = vmatprep.subr.mxu0 0.0
    %445 = vmatpush1.msra.mxu0 0.0
    %446 = vmatprep.subr.mxu0 0.0
    %447 = vmatpush1.msra.mxu0 0.0
    %448 = vmatprep.subr.mxu0 0.0
    %449 = vmatpush1.msra.mxu0 0.0
    %450 = vmatprep.subr.mxu0 0.0
    %451 = vmatpush1.msra.mxu0 0.0
    %452 = vmatprep.subr.mxu0 0.0
    %453 = vmatpush1.msra.mxu0 0.0
    %454 = vmatprep.subr.mxu0 0.0
    %455 = vmatpush1.msra.mxu0 0.0
    %456 = vmatprep.subr.mxu0 0.0
    %457 = vmatpush1.msra.mxu0 0.0
    %458 = vmatprep.subr.mxu0 0.0
    %459 = vmatpush1.msra.mxu0 0.0
    %460 = vmatprep.mubr.f32.mxu0 0.0
    %461 = vmatmul.mubr.f32.gmra.mrb[0].mxu0 %v394
    %v462 = vpop.f32.mrb[0].mxu0
    %v463 = vadd.f32 0.0, %v462
    %v464 = vpop.f32.mrb[0].mxu0
    %465 = vdwg.mxu0
    %v467 = vsel %vm36, %v180, 0
    %469 = vmatprep.subr.mxu0 0.0
    %470 = vmatpush1.msra.mxu0 %v207
    %471 = vmatprep.subr.mxu0 0.0
    %472 = vmatpush1.msra.mxu0 %v208
    %473 = vmatprep.subr.mxu0 0.0
    %474 = vmatpush1.msra.mxu0 %v209
    %475 = vmatprep.subr.mxu0 0.0
    %476 = vmatpush1.msra.mxu0 %v210
    %477 = vmatprep.subr.mxu0 0.0
    %478 = vmatpush1.msra.mxu0 %v211
    %479 = vmatprep.subr.mxu0 0.0
    %480 = vmatpush1.msra.mxu0 %v212
    %481 = vmatprep.subr.mxu0 0.0
    %482 = vmatpush1.msra.mxu0 %v213
    %483 = vmatprep.subr.mxu0 0.0
    %484 = vmatpush1.msra.mxu0 %v214
    %485 = vmatprep.subr.mxu0 0.0
    %486 = vmatpush1.msra.mxu0 0.0
    %487 = vmatprep.subr.mxu0 0.0
    %488 = vmatpush1.msra.mxu0 0.0
    %489 = vmatprep.subr.mxu0 0.0
    %490 = vmatpush1.msra.mxu0 0.0
    %491 = vmatprep.subr.mxu0 0.0
    %492 = vmatpush1.msra.mxu0 0.0
    %493 = vmatprep.subr.mxu0 0.0
    %494 = vmatpush1.msra.mxu0 0.0
    %495 = vmatprep.subr.mxu0 0.0
    %496 = vmatpush1.msra.mxu0 0.0
    %497 = vmatprep.subr.mxu0 0.0
    %498 = vmatpush1.msra.mxu0 0.0
    %499 = vmatprep.subr.mxu0 0.0
    %500 = vmatpush1.msra.mxu0 0.0
    %501 = vmatprep.subr.mxu0 0.0
    %502 = vmatpush1.msra.mxu0 0.0
    %503 = vmatprep.subr.mxu0 0.0
    %504 = vmatpush1.msra.mxu0 0.0
    %505 = vmatprep.subr.mxu0 0.0
    %506 = vmatpush1.msra.mxu0 0.0
    %507 = vmatprep.subr.mxu0 0.0
    %508 = vmatpush1.msra.mxu0 0.0
    %509 = vmatprep.subr.mxu0 0.0
    %510 = vmatpush1.msra.mxu0 0.0
    %511 = vmatprep.subr.mxu0 0.0
    %512 = vmatpush1.msra.mxu0 0.0
    %513 = vmatprep.subr.mxu0 0.0
    %514 = vmatpush1.msra.mxu0 0.0
    %515 = vmatprep.subr.mxu0 0.0
    %516 = vmatpush1.msra.mxu0 0.0
    %517 = vmatprep.subr.mxu0 0.0
    %518 = vmatpush1.msra.mxu0 0.0
    %519 = vmatprep.subr.mxu0 0.0
    %520 = vmatpush1.msra.mxu0 0.0
    %521 = vmatprep.subr.mxu0 0.0
    %522 = vmatpush1.msra.mxu0 0.0
    %523 = vmatprep.subr.mxu0 0.0
    %524 = vmatpush1.msra.mxu0 0.0
    %525 = vmatprep.subr.mxu0 0.0
    %526 = vmatpush1.msra.mxu0 0.0
    %527 = vmatprep.subr.mxu0 0.0
    %528 = vmatpush1.msra.mxu0 0.0
    %529 = vmatprep.subr.mxu0 0.0
    %530 = vmatpush1.msra.mxu0 0.0
    %531 = vmatprep.subr.mxu0 0.0
    %532 = vmatpush1.msra.mxu0 0.0
    %533 = vmatprep.mubr.f32.mxu0 0.0
    %534 = vmatmul.mubr.f32.gmra.mrb[0].mxu0 %v467
    %v535 = vpop.f32.mrb[0].mxu0
    %v536 = vadd.f32 0.0, %v535
    %v537 = vpop.f32.mrb[0].mxu0
    %538 = vdwg.mxu0
    %v540 = vsel %vm36, %v171, 0
    %542 = vmatprep.subr.mxu0 0.0
    %543 = vmatpush1.msra.mxu0 %v215
    %544 = vmatprep.subr.mxu0 0.0
    %545 = vmatpush1.msra.mxu0 %v216
    %546 = vmatprep.subr.mxu0 0.0
    %547 = vmatpush1.msra.mxu0 %v217
    %548 = vmatprep.subr.mxu0 0.0
    %549 = vmatpush1.msra.mxu0 %v218
    %550 = vmatprep.subr.mxu0 0.0
    %551 = vmatpush1.msra.mxu0 %v219
    %552 = vmatprep.subr.mxu0 0.0
    %553 = vmatpush1.msra.mxu0 %v220
    %554 = vmatprep.subr.mxu0 0.0
    %555 = vmatpush1.msra.mxu0 %v221
    %556 = vmatprep.subr.mxu0 0.0
    %557 = vmatpush1.msra.mxu0 %v222
    %558 = vmatprep.subr.mxu0 0.0
    %559 = vmatpush1.msra.mxu0 0.0
    %560 = vmatprep.subr.mxu0 0.0
    %561 = vmatpush1.msra.mxu0 0.0
    %562 = vmatprep.subr.mxu0 0.0
    %563 = vmatpush1.msra.mxu0 0.0
    %564 = vmatprep.subr.mxu0 0.0
    %565 = vmatpush1.msra.mxu0 0.0
    %566 = vmatprep.subr.mxu0 0.0
    %567 = vmatpush1.msra.mxu0 0.0
    %568 = vmatprep.subr.mxu0 0.0
    %569 = vmatpush1.msra.mxu0 0.0
    %570 = vmatprep.subr.mxu0 0.0
    %571 = vmatpush1.msra.mxu0 0.0
    %572 = vmatprep.subr.mxu0 0.0
    %573 = vmatpush1.msra.mxu0 0.0
    %574 = vmatprep.subr.mxu0 0.0
    %575 = vmatpush1.msra.mxu0 0.0
    %576 = vmatprep.subr.mxu0 0.0
    %577 = vmatpush1.msra.mxu0 0.0
    %578 = vmatprep.subr.mxu0 0.0
    %579 = vmatpush1.msra.mxu0 0.0
    %580 = vmatprep.subr.mxu0 0.0
    %581 = vmatpush1.msra.mxu0 0.0
    %582 = vmatprep.subr.mxu0 0.0
    %583 = vmatpush1.msra.mxu0 0.0
    %584 = vmatprep.subr.mxu0 0.0
    %585 = vmatpush1.msra.mxu0 0.0
    %586 = vmatprep.subr.mxu0 0.0
    %587 = vmatpush1.msra.mxu0 0.0
    %588 = vmatprep.subr.mxu0 0.0
    %589 = vmatpush1.msra.mxu0 0.0
    %590 = vmatprep.subr.mxu0 0.0
    %591 = vmatpush1.msra.mxu0 0.0
    %592 = vmatprep.subr.mxu0 0.0
    %593 = vmatpush1.msra.mxu0 0.0
    %594 = vmatprep.subr.mxu0 0.0
    %595 = vmatpush1.msra.mxu0 0.0
    %596 = vmatprep.subr.mxu0 0.0
    %597 = vmatpush1.msra.mxu0 0.0
    %598 = vmatprep.subr.mxu0 0.0
    %599 = vmatpush1.msra.mxu0 0.0
    %600 = vmatprep.subr.mxu0 0.0
    %601 = vmatpush1.msra.mxu0 0.0
    %602 = vmatprep.subr.mxu0 0.0
    %603 = vmatpush1.msra.mxu0 0.0
    %604 = vmatprep.subr.mxu0 0.0
    %605 = vmatpush1.msra.mxu0 0.0
    %606 = vmatprep.mubr.f32.mxu0 0.0
    %607 = vmatmul.mubr.f32.gmra.mrb[0].mxu0 %v540
    %v608 = vpop.f32.mrb[0].mxu0
    %v609 = vadd.f32 0.0, %v608
    %v610 = vpop.f32.mrb[0].mxu0
    %611 = vdwg.mxu0
    %v613 = vsel %vm36, %v181, 0
    %615 = vmatprep.subr.mxu0 0.0
    %616 = vmatpush1.msra.mxu0 %v223
    %617 = vmatprep.subr.mxu0 0.0
    %618 = vmatpush1.msra.mxu0 %v224
    %619 = vmatprep.subr.mxu0 0.0
    %620 = vmatpush1.msra.mxu0 %v225
    %621 = vmatprep.subr.mxu0 0.0
    %622 = vmatpush1.msra.mxu0 %v226
    %623 = vmatprep.subr.mxu0 0.0
    %624 = vmatpush1.msra.mxu0 %v227
    %625 = vmatprep.subr.mxu0 0.0
    %626 = vmatpush1.msra.mxu0 %v228
    %627 = vmatprep.subr.mxu0 0.0
    %628 = vmatpush1.msra.mxu0 %v229
    %629 = vmatprep.subr.mxu0 0.0
    %630 = vmatpush1.msra.mxu0 %v230
    %631 = vmatprep.subr.mxu0 0.0
    %632 = vmatpush1.msra.mxu0 0.0
    %633 = vmatprep.subr.mxu0 0.0
    %634 = vmatpush1.msra.mxu0 0.0
    %635 = vmatprep.subr.mxu0 0.0
    %636 = vmatpush1.msra.mxu0 0.0
    %637 = vmatprep.subr.mxu0 0.0
    %638 = vmatpush1.msra.mxu0 0.0
    %639 = vmatprep.subr.mxu0 0.0
    %640 = vmatpush1.msra.mxu0 0.0
    %641 = vmatprep.subr.mxu0 0.0
    %642 = vmatpush1.msra.mxu0 0.0
    %643 = vmatprep.subr.mxu0 0.0
    %644 = vmatpush1.msra.mxu0 0.0
    %645 = vmatprep.subr.mxu0 0.0
    %646 = vmatpush1.msra.mxu0 0.0
    %647 = vmatprep.subr.mxu0 0.0
    %648 = vmatpush1.msra.mxu0 0.0
    %649 = vmatprep.subr.mxu0 0.0
    %650 = vmatpush1.msra.mxu0 0.0
    %651 = vmatprep.subr.mxu0 0.0
    %652 = vmatpush1.msra.mxu0 0.0
    %653 = vmatprep.subr.mxu0 0.0
    %654 = vmatpush1.msra.mxu0 0.0
    %655 = vmatprep.subr.mxu0 0.0
    %656 = vmatpush1.msra.mxu0 0.0
    %657 = vmatprep.subr.mxu0 0.0
    %658 = vmatpush1.msra.mxu0 0.0
    %659 = vmatprep.subr.mxu0 0.0
    %660 = vmatpush1.msra.mxu0 0.0
    %661 = vmatprep.subr.mxu0 0.0
    %662 = vmatpush1.msra.mxu0 0.0
    %663 = vmatprep.subr.mxu0 0.0
    %664 = vmatpush1.msra.mxu0 0.0
    %665 = vmatprep.subr.mxu0 0.0
    %666 = vmatpush1.msra.mxu0 0.0
    %667 = vmatprep.subr.mxu0 0.0
    %668 = vmatpush1.msra.mxu0 0.0
    %669 = vmatprep.subr.mxu0 0.0
    %670 = vmatpush1.msra.mxu0 0.0
    %671 = vmatprep.subr.mxu0 0.0
    %672 = vmatpush1.msra.mxu0 0.0
    %673 = vmatprep.subr.mxu0 0.0
    %674 = vmatpush1.msra.mxu0 0.0
    %675 = vmatprep.subr.mxu0 0.0
    %676 = vmatpush1.msra.mxu0 0.0
    %677 = vmatprep.subr.mxu0 0.0
    %678 = vmatpush1.msra.mxu0 0.0
    %679 = vmatprep.mubr.f32.mxu0 0.0
    %680 = vmatmul.mubr.f32.gmra.mrb[0].mxu0 %v613
    %v681 = vpop.f32.mrb[0].mxu0
    %v682 = vadd.f32 0.0, %v681
    %v683 = vpop.f32.mrb[0].mxu0
    %684 = vdwg.mxu0
    %v686 = vsel %vm36, %v178, 0
    %688 = vmatprep.subr.mxu0 0.0
    %689 = vmatpush1.msra.mxu0 %v231
    %690 = vmatprep.subr.mxu0 0.0
    %691 = vmatpush1.msra.mxu0 %v232
    %692 = vmatprep.subr.mxu0 0.0
    %693 = vmatpush1.msra.mxu0 %v233
    %694 = vmatprep.subr.mxu0 0.0
    %695 = vmatpush1.msra.mxu0 %v234
    %696 = vmatprep.subr.mxu0 0.0
    %697 = vmatpush1.msra.mxu0 %v235
    %698 = vmatprep.subr.mxu0 0.0
    %699 = vmatpush1.msra.mxu0 %v236
    %700 = vmatprep.subr.mxu0 0.0
    %701 = vmatpush1.msra.mxu0 %v237
    %702 = vmatprep.subr.mxu0 0.0
    %703 = vmatpush1.msra.mxu0 %v238
    %704 = vmatprep.subr.mxu0 0.0
    %705 = vmatpush1.msra.mxu0 0.0
    %706 = vmatprep.subr.mxu0 0.0
    %707 = vmatpush1.msra.mxu0 0.0
    %708 = vmatprep.subr.mxu0 0.0
    %709 = vmatpush1.msra.mxu0 0.0
    %710 = vmatprep.subr.mxu0 0.0
    %711 = vmatpush1.msra.mxu0 0.0
    %712 = vmatprep.subr.mxu0 0.0
    %713 = vmatpush1.msra.mxu0 0.0
    %714 = vmatprep.subr.mxu0 0.0
    %715 = vmatpush1.msra.mxu0 0.0
    %716 = vmatprep.subr.mxu0 0.0
    %717 = vmatpush1.msra.mxu0 0.0
    %718 = vmatprep.subr.mxu0 0.0
    %719 = vmatpush1.msra.mxu0 0.0
    %720 = vmatprep.subr.mxu0 0.0
    %721 = vmatpush1.msra.mxu0 0.0
    %722 = vmatprep.subr.mxu0 0.0
    %723 = vmatpush1.msra.mxu0 0.0
    %724 = vmatprep.subr.mxu0 0.0
    %725 = vmatpush1.msra.mxu0 0.0
    %726 = vmatprep.subr.mxu0 0.0
    %727 = vmatpush1.msra.mxu0 0.0
    %728 = vmatprep.subr.mxu0 0.0
    %729 = vmatpush1.msra.mxu0 0.0
    %730 = vmatprep.subr.mxu0 0.0
    %731 = vmatpush1.msra.mxu0 0.0
    %732 = vmatprep.subr.mxu0 0.0
    %733 = vmatpush1.msra.mxu0 0.0
    %734 = vmatprep.subr.mxu0 0.0
    %735 = vmatpush1.msra.mxu0 0.0
    %736 = vmatprep.subr.mxu0 0.0
    %737 = vmatpush1.msra.mxu0 0.0
    %738 = vmatprep.subr.mxu0 0.0
    %739 = vmatpush1.msra.mxu0 0.0
    %740 = vmatprep.subr.mxu0 0.0
    %741 = vmatpush1.msra.mxu0 0.0
    %742 = vmatprep.subr.mxu0 0.0
    %743 = vmatpush1.msra.mxu0 0.0
    %744 = vmatprep.subr.mxu0 0.0
    %745 = vmatpush1.msra.mxu0 0.0
    %746 = vmatprep.subr.mxu0 0.0
    %747 = vmatpush1.msra.mxu0 0.0
    %748 = vmatprep.subr.mxu0 0.0
    %749 = vmatpush1.msra.mxu0 0.0
    %750 = vmatprep.subr.mxu0 0.0
    %751 = vmatpush1.msra.mxu0 0.0
    %752 = vmatprep.mubr.f32.mxu0 0.0
    %753 = vmatmul.mubr.f32.gmra.mrb[0].mxu0 %v686
    %v754 = vpop.f32.mrb[0].mxu0
    %v755 = vadd.f32 0.0, %v754
    %v756 = vpop.f32.mrb[0].mxu0
    %757 = vdwg.mxu0
    %v759 = vsel %vm36, %v182, 0
    %761 = vmatprep.subr.mxu0 0.0
    %762 = vmatpush1.msra.mxu0 %v239
    %763 = vmatprep.subr.mxu0 0.0
    %764 = vmatpush1.msra.mxu0 %v240
    %765 = vmatprep.subr.mxu0 0.0
    %766 = vmatpush1.msra.mxu0 %v241
    %767 = vmatprep.subr.mxu0 0.0
    %768 = vmatpush1.msra.mxu0 %v242
    %769 = vmatprep.subr.mxu0 0.0
    %770 = vmatpush1.msra.mxu0 %v243
    %771 = vmatprep.subr.mxu0 0.0
    %772 = vmatpush1.msra.mxu0 %v244
    %773 = vmatprep.subr.mxu0 0.0
    %774 = vmatpush1.msra.mxu0 %v245
    %775 = vmatprep.subr.mxu0 0.0
    %776 = vmatpush1.msra.mxu0 %v246
    %777 = vmatprep.subr.mxu0 0.0
    %778 = vmatpush1.msra.mxu0 0.0
    %779 = vmatprep.subr.mxu0 0.0
    %780 = vmatpush1.msra.mxu0 0.0
    %781 = vmatprep.subr.mxu0 0.0
    %782 = vmatpush1.msra.mxu0 0.0
    %783 = vmatprep.subr.mxu0 0.0
    %784 = vmatpush1.msra.mxu0 0.0
    %785 = vmatprep.subr.mxu0 0.0
    %786 = vmatpush1.msra.mxu0 0.0
    %787 = vmatprep.subr.mxu0 0.0
    %788 = vmatpush1.msra.mxu0 0.0
    %789 = vmatprep.subr.mxu0 0.0
    %790 = vmatpush1.msra.mxu0 0.0
    %791 = vmatprep.subr.mxu0 0.0
    %792 = vmatpush1.msra.mxu0 0.0
    %793 = vmatprep.subr.mxu0 0.0
    %794 = vmatpush1.msra.mxu0 0.0
    %795 = vmatprep.subr.mxu0 0.0
    %796 = vmatpush1.msra.mxu0 0.0
    %797 = vmatprep.subr.mxu0 0.0
    %798 = vmatpush1.msra.mxu0 0.0
    %799 = vmatprep.subr.mxu0 0.0
    %800 = vmatpush1.msra.mxu0 0.0
    %801 = vmatprep.subr.mxu0 0.0
    %802 = vmatpush1.msra.mxu0 0.0
    %803 = vmatprep.subr.mxu0 0.0
    %804 = vmatpush1.msra.mxu0 0.0
    %805 = vmatprep.subr.mxu0 0.0
    %806 = vmatpush1.msra.mxu0 0.0
    %807 = vmatprep.subr.mxu0 0.0
    %808 = vmatpush1.msra.mxu0 0.0
    %809 = vmatprep.subr.mxu0 0.0
    %810 = vmatpush1.msra.mxu0 0.0
    %811 = vmatprep.subr.mxu0 0.0
    %812 = vmatpush1.msra.mxu0 0.0
    %813 = vmatprep.subr.mxu0 0.0
    %814 = vmatpush1.msra.mxu0 0.0
    %815 = vmatprep.subr.mxu0 0.0
    %816 = vmatpush1.msra.mxu0 0.0
    %817 = vmatprep.subr.mxu0 0.0
    %818 = vmatpush1.msra.mxu0 0.0
    %819 = vmatprep.subr.mxu0 0.0
    %820 = vmatpush1.msra.mxu0 0.0
    %821 = vmatprep.subr.mxu0 0.0
    %822 = vmatpush1.msra.mxu0 0.0
    %823 = vmatprep.subr.mxu0 0.0
    %824 = vmatpush1.msra.mxu0 0.0
    %825 = vmatprep.mubr.f32.mxu0 0.0
    %826 = vmatmul.mubr.f32.gmra.mrb[0].mxu0 %v759
    %v827 = vpop.f32.mrb[0].mxu0
    %v828 = vadd.f32 0.0, %v827
    %v829 = vpop.f32.mrb[0].mxu0
    %830 = vdwg.mxu0
    %vm831 = vcmask 254976
    %v832 = vsel %vm831, %v317, 0.0
    %v833 = vsel %vm831, %v390, 0.0
    %v834 = vadd.f32 %v832, %v833
    %v835 = vsel %vm831, %v463, 0.0
    %v836 = vadd.f32 %v834, %v835
    %v837 = vsel %vm831, %v536, 0.0
    %v838 = vadd.f32 %v836, %v837
    %v839 = vsel %vm831, %v609, 0.0
    %v840 = vadd.f32 %v838, %v839
    %v841 = vsel %vm831, %v682, 0.0
    %v842 = vadd.f32 %v840, %v841
    %v843 = vsel %vm831, %v755, 0.0
    %v844 = vadd.f32 %v842, %v843
    %v845 = vsel %vm831, %v828, 0.0
    %v846 = vadd.f32 %v844, %v845
    %v847 = vld [vmem:[%s4] sm:$0x1]
    %v849 = vlaneseq
    %v850 = vshrl.u32 %v849, 7
    %v851 = vsub.s32 0, %v850
    %v852 = vrot.slane %v847, %v851
    %v854 = vadd.f32 %v846, %v852
    %v855 = vmul.f32 %v854, %v854
    %v856 = vsel %vm831, %v855, 0.0
    %857 = vadd.xlane.f32.xlu0 %v856
    %v858 = vpop.xlane.xlu0 %857
    %v859 = vrsqrt.pop %v858
    %v860 = vmul.f32 %v854, %v859
    %861 = vst.msk [vmem:[#allocation2] sm:$0x3] %vm831, %v860
    // Predicated region
    $region22: #{forward.1} parent=1 // pred_check
      _
    $region23: #{forward.1} parent=1 // pred_check_branch
      %863 = sbr.rel (0) target = $region25
    $region24: #{forward.1} parent=1 // pred_region
      %s865 = ssub.s32 32, 32
      %866 = vsyncadd [#allocation3], %s865
      %s868 = sshll.u32 [#allocation2], 4
      %s869 = int_to_ptr.vmem [resolvable:$true] %s868
      %871 = dma.vmem_to_hbm [thread:$0]  %s869, 32, %s5, [#allocation3]
    $region25: #{forward.1} parent=1 // pred_fallthru
      _
    // Predicated region
    $region26: #{forward.1} parent=1 // pred_check
      _
    $region27: #{forward.1} parent=1 // pred_check_branch
      %873 = sbr.rel (0) target = $region29
    $region28: #{forward.1} parent=1 // pred_region
      %874 = dma.done [#allocation3], 32
    $region29: #{forward.1} parent=1 // pred_fallthru
      _
    %875 = vsyncpa [#allocation3], 1

</llo_original>
